<compile_context>
chip_gen: v7x
topology: tpu7x:2x2x1
jax: 0.10.0
libtpu: 0.0.40
codegen_flags: <defaults>
</compile_context>

<pallas_src>
import jax
import jax.numpy as jnp
from jax.experimental import pallas as pl
from jax.experimental.pallas import tpu as pltpu


def _round_up(v, m):
    return ((v + m - 1) // m) * m


def _residual_linear_kernel(x_ref, w_ref, b_ref, o_ref):
    # x_ref: (tm, D) input dtype; w_ref: (D, D) bf16; b_ref: (1, D) f32; o_ref: (tm, D)
    x = x_ref[...]
    # fn(x): Linear layer on the MXU.  bf16 operands run at native MXU rate;
    # accumulate in f32.
    y = jnp.dot(x.astype(jnp.bfloat16), w_ref[...],
                preferred_element_type=jnp.float32)
    y = y + b_ref[...]
    # Residual add (VPU, f32) against the *original* x, single cast at the end.
    o_ref[...] = (y + x.astype(jnp.float32)).astype(o_ref.dtype)


def residual_forward(x, w, b, *, tm=512):
    """Computes fn(x) + x with fn(x) = x @ w + b, fused in one Pallas kernel.

    x: (B, N, D)   w: (D, D)   b: (D,)
    tm: M-tile size.  512 (multiple of 256) is a good default for v5e/v6e/v7x;
        it is clamped down automatically for small inputs.
    """
    B, N, D = x.shape
    M = B * N

    # Large tile to amortize per-step overhead / fill the MXU M dimension, but
    # never larger than the (8-aligned) token count.  Keep it a multiple of 8.
    tm = max(8, min(_round_up(tm, 8), _round_up(M, 8)))
    Mp = _round_up(M, tm)
    grid = (Mp // tm,)

    x2 = x.reshape(M, D)
    if Mp != M:
        # Tail handling: zero-pad rows, slice them off after the kernel.
        x2 = jnp.pad(x2, ((0, Mp - M), (0, 0)))

    w_bf16 = w.astype(jnp.bfloat16)               # bf16 MXU operand
    b2 = b.reshape(1, D).astype(jnp.float32)      # bias added in f32

    # VMEM budget: double-buffered x/out tiles + single-buffered w/b.
    x_bytes = tm * D * x2.dtype.itemsize
    o_bytes = tm * D * x.dtype.itemsize
    wb_bytes = D * D * 2 + D * 4
    vmem_needed = 2 * (x_bytes + o_bytes) + wb_bytes
    # Explicit limit: above the 16 MiB v5e scoped default, but capped well under
    # v7x's 64 MiB physical VMEM so pipelining depth is never silently reduced.
    vmem_limit = int(min(max(2 * vmem_needed, 16 * 1024 * 1024),
                         48 * 1024 * 1024))

    cost = pl.CostEstimate(
        flops=2 * Mp * D * D,
        transcendentals=0,
        bytes_accessed=int(Mp * D * (x2.dtype.itemsize + x.dtype.itemsize)
                           + wb_bytes),
    )

    out = pl.pallas_call(
        _residual_linear_kernel,
        out_shape=jax.ShapeDtypeStruct((Mp, D), x.dtype),
        grid_spec=pl.GridSpec(
            grid=grid,
            in_specs=[
                # x tile, streamed (double-buffered by the pipeline).
                pl.BlockSpec((tm, D), lambda i: (i, 0)),
                # Weights / bias: constant index_map -> resident after first
                # fetch; single-buffer them to save VMEM.
                pl.BlockSpec((D, D), lambda i: (0, 0),
                             pipeline_mode=pl.Buffered(1)),
                pl.BlockSpec((1, D), lambda i: (0, 0),
                             pipeline_mode=pl.Buffered(1)),
            ],
            out_specs=pl.BlockSpec((tm, D), lambda i: (i, 0)),
        ),
        compiler_params=pltpu.CompilerParams(
            dimension_semantics=("parallel",),   # lets v7x shard the loop on 2 TCs
            vmem_limit_bytes=vmem_limit,
        ),
        cost_estimate=cost,
    )(x2, w_bf16, b2)

    if Mp != M:
        out = out[:M]
    return out.reshape(B, N, D)


if __name__ == "__main__":
    B, N, D = 2, 64, 128
    key = jax.random.PRNGKey(0)
    kx, kw, kb = jax.random.split(key, 3)

    x = jax.random.normal(kx, (B, N, D), dtype=jnp.float32)
    # Deterministic "fn" parameters (Linear layer: W (D, D), b (D,)).
    w = jax.random.normal(kw, (D, D), dtype=jnp.float32) * 0.02
    b = jax.random.normal(kb, (D,), dtype=jnp.float32) * 0.02

    # --- f32 input path (residual added in full f32 precision) ---
    out = jax.block_until_ready(residual_forward(x, w, b))
    # Reference with the same bf16 MXU operands / f32 accumulation.
    ref = (jnp.dot(x.astype(jnp.bfloat16), w.astype(jnp.bfloat16),
                   preferred_element_type=jnp.float32) + b + x)
    assert out.shape == (B, N, D)
    assert jnp.allclose(out, ref, atol=1e-3, rtol=1e-3)

    # --- bf16 input path (what the real model would feed; halves HBM traffic) ---
    xb = x.astype(jnp.bfloat16)
    outb = jax.block_until_ready(residual_forward(xb, w, b))
    refb = (jnp.dot(xb, w.astype(jnp.bfloat16),
                    preferred_element_type=jnp.float32)
            + b + xb.astype(jnp.float32)).astype(jnp.bfloat16)
    assert jnp.allclose(outb.astype(jnp.float32), refb.astype(jnp.float32),
                        atol=5e-2, rtol=5e-2)

    # --- non-divisible token count: exercises the pad + slice tail path ---
    x_odd = jax.random.normal(kx, (2, 48, D), dtype=jnp.float32)  # M=96
    out_odd = jax.block_until_ready(residual_forward(x_odd, w, b, tm=64))
    ref_odd = (jnp.dot(x_odd.astype(jnp.bfloat16), w.astype(jnp.bfloat16),
                       preferred_element_type=jnp.float32) + b + x_odd)
    assert out_odd.shape == (2, 48, D)
    assert jnp.allclose(out_odd, ref_odd, atol=1e-3, rtol=1e-3)

    print("KERNEL_OK")
</pallas_src>

<mosaic_0001>
module attributes {stable_mosaic.version = 11 : i64} {
  func.func @_residual_linear_kernel(%arg0: i32, %arg1: memref<128x128xf32, #tpu.memory_space<vmem>>, %arg2: memref<128x128xbf16, #tpu.memory_space<vmem>>, %arg3: memref<1x128xf32, #tpu.memory_space<vmem>>, %arg4: memref<128x128xf32, #tpu.memory_space<vmem>>) attributes {dimension_semantics = [#tpu.dimension_semantics<parallel>], iteration_bounds = array<i64: 1>, scalar_prefetch = 0 : i64, scratch_operands = 0 : i64, tpu.core_type = #tpu.core_type<tc>, window_params = [{transform_indices = @transform_0, window_bounds = array<i64: 128, 128>}, {pipeline_mode = #tpu.pipeline_mode<synchronous>, transform_indices = @transform_1, window_bounds = array<i64: 128, 128>}, {pipeline_mode = #tpu.pipeline_mode<synchronous>, transform_indices = @transform_2, window_bounds = array<i64: 1, 128>}, {transform_indices = @transform_3, window_bounds = array<i64: 128, 128>}]} {
    %c0 = arith.constant 0 : index
    %c0_0 = arith.constant 0 : index
    %0 = vector.load %arg1[%c0, %c0_0] : memref<128x128xf32, #tpu.memory_space<vmem>>, vector<128x128xf32>
    %1 = arith.truncf %0 : vector<128x128xf32> to vector<128x128xbf16>
    %c0_1 = arith.constant 0 : index
    %c0_2 = arith.constant 0 : index
    %2 = vector.load %arg2[%c0_1, %c0_2] : memref<128x128xbf16, #tpu.memory_space<vmem>>, vector<128x128xbf16>
    %cst = arith.constant dense<0.000000e+00> : vector<128x128xf32>
    %3 = tpu.matmul %1, %2, %cst {dimension_numbers = #tpu.dot_dimension_numbers<[1], [0], [0], [1], [0, 0, 1, 1], [], []>} : vector<128x128xbf16>, vector<128x128xbf16>, vector<128x128xf32> -> vector<128x128xf32>
    %c0_3 = arith.constant 0 : index
    %c0_4 = arith.constant 0 : index
    %4 = vector.load %arg3[%c0_3, %c0_4] : memref<1x128xf32, #tpu.memory_space<vmem>>, vector<1x128xf32>
    %5 = vector.broadcast %4 : vector<1x128xf32> to vector<128x128xf32>
    %6 = arith.addf %3, %5 : vector<128x128xf32>
    %7 = arith.addf %6, %0 : vector<128x128xf32>
    %c0_5 = arith.constant 0 : index
    %c0_6 = arith.constant 0 : index
    %8 = vector.load %arg4[%c0_5, %c0_6] : memref<128x128xf32, #tpu.memory_space<vmem>>, vector<128x128xf32>
    tpu.vector_store %arg4[%c0_5, %c0_6], %7 {strides = array<i32>} : memref<128x128xf32, #tpu.memory_space<vmem>>, vector<128x128xf32>,
    return
  }
  func.func @transform_0(%arg0: i32) -> (i32, i32) {
    %c0_i32 = arith.constant 0 : i32
    %c0_i32_0 = arith.constant 0 : i32
    return %arg0, %c0_i32 : i32, i32
  }
  func.func @transform_1(%arg0: i32) -> (i32, i32) {
    %c0_i32 = arith.constant 0 : i32
    %c0_i32_0 = arith.constant 0 : i32
    %c0_i32_1 = arith.constant 0 : i32
    return %c0_i32, %c0_i32_0 : i32, i32
  }
  func.func @transform_2(%arg0: i32) -> (i32, i32) {
    %c0_i32 = arith.constant 0 : i32
    %c0_i32_0 = arith.constant 0 : i32
    %c0_i32_1 = arith.constant 0 : i32
    return %c0_i32, %c0_i32_0 : i32, i32
  }
  func.func @transform_3(%arg0: i32) -> (i32, i32) {
    %c0_i32 = arith.constant 0 : i32
    %c0_i32_0 = arith.constant 0 : i32
    return %arg0, %c0_i32 : i32, i32
  }
}

</mosaic_0001>

<llo_original>
// kernel: tpu_custom_call.1
$region0: #{tpu_custom_call.1}
  #allocation0 [shape = 'u32[]', space=smem, size = 0x4, offset = 0x4, fixed_abs, tag = 'smem constant byte address 0x4 - core index']
  #allocation1 [shape = 'u32[144,128]{1,0:T(1,128)}', space=vmem, size = 0x12000, scoped, tag = 'internal scratch']
  %s0 = inlined_call_operand.hbm [shape: f32[128,128], index: 0, kind: input, shape index: {}]
  %s1 = inlined_call_operand.hbm [shape: bf16[128,128], index: 1, kind: input, shape index: {}]
  %s2 = inlined_call_operand.vmem [shape: f32[1,128], index: 2, kind: input, shape index: {}]
  %s3 = inlined_call_operand.hbm [shape: f32[128,128], index: 3, kind: output, shape index: {}]
  %s4 = sld [smem:[#allocation0]]
  $region30: #{tpu_custom_call.1} parent=0
    _
  %s6 = ssub.s32 1, %s4
  %s7 = scalar_select 0, %s6, %s4
  $region1: #{tpu_custom_call.1} parent=0
    #allocation2 [shape = 'u8[65536]{0}', space=vmem, size = 0x10000, scoped, tag = 'input window, operand 0, single buffered']
    #allocation3 [shape = 's32[1]{0}', space=sflag, size = 0x4, scoped, tag = 'scoped memory for tpu_custom_call.1']
    #allocation4 [shape = 's32[1]{0}', space=sflag, size = 0x4, scoped, tag = 'scoped memory for tpu_custom_call.1']
    #allocation5 [shape = 'u8[32768]{0}', space=vmem, size = 0x8000, scoped, tag = 'input window, operand 1, single buffered']
    #allocation6 [shape = 's32[1]{0}', space=sflag, size = 0x4, scoped, tag = 'scoped memory for tpu_custom_call.1']
    #allocation7 [shape = 'u8[65536]{0}', space=vmem, size = 0x10000, scoped, tag = 'output window, operand 0, single buffered']
    %8 = vsyncpa [#allocation3], 0
    %9 = vsyncpa [#allocation6], 0
    %10 = vsyncpa [#allocation4], 0
    // Predicated region
    $region2: #{tpu_custom_call.1} parent=1 // pred_check
      _
    $region3: #{tpu_custom_call.1} parent=1 // pred_check_branch
      %12 = sbr.rel (0) target = $region5
    $region4: #{tpu_custom_call.1} parent=1 // pred_region
      %s14 = ssub.s32 2048, 2048
      %15 = vsyncadd [#allocation3], %s14
      %s16 = sshll.u32 [#allocation2], 4
      %s17 = int_to_ptr.vmem [resolvable:$true] %s16
      %22 = dma.hbm_to_vmem [thread:$0]  %s0, 2048, %s17, [#allocation3], 128, 128, 8
    $region5: #{tpu_custom_call.1} parent=1 // pred_fallthru
      _
    // Predicated region
    $region6: #{tpu_custom_call.1} parent=1 // pred_check
      _
    $region7: #{tpu_custom_call.1} parent=1 // pred_check_branch
      %24 = sbr.rel (0) target = $region9
    $region8: #{tpu_custom_call.1} parent=1 // pred_region
      %s26 = ssub.s32 1024, 1024
      %27 = vsyncadd [#allocation6], %s26
      %s28 = sshll.u32 [#allocation5], 4
      %s29 = int_to_ptr.vmem [resolvable:$true] %s28
      %34 = dma.hbm_to_vmem [thread:$0]  %s1, 1024, %s29, [#allocation6], 64, 64, 4
    $region9: #{tpu_custom_call.1} parent=1 // pred_fallthru
      _
    // Predicated region
    $region10: #{tpu_custom_call.1} parent=1 // pred_check
      _
    $region11: #{tpu_custom_call.1} parent=1 // pred_check_branch
      %36 = sbr.rel (0) target = $region13
    $region12: #{tpu_custom_call.1} parent=1 // pred_region
      _
    $region13: #{tpu_custom_call.1} parent=1 // pred_fallthru
      _
    // Predicated region
    $region14: #{tpu_custom_call.1} parent=1 // pred_check
      _
    $region15: #{tpu_custom_call.1} parent=1 // pred_check_branch
      %38 = sbr.rel (0) target = $region17
    $region16: #{tpu_custom_call.1} parent=1 // pred_region
      %39 = dma.done [#allocation3], 2048
    $region17: #{tpu_custom_call.1} parent=1 // pred_fallthru
      _
    // Predicated region
    $region18: #{tpu_custom_call.1} parent=1 // pred_check
      _
    $region19: #{tpu_custom_call.1} parent=1 // pred_check_branch
      %41 = sbr.rel (0) target = $region21
    $region20: #{tpu_custom_call.1} parent=1 // pred_region
      %42 = dma.done [#allocation6], 1024
    $region21: #{tpu_custom_call.1} parent=1 // pred_fallthru
      _
    %v44 = vld [vmem:[#allocation2] sm:$0xff]
    %v45 = vld [vmem:[#allocation2 + $0x8] sm:$0xff]
    %v46 = vld [vmem:[#allocation2 + $0x10] sm:$0xff]
    %v47 = vld [vmem:[#allocation2 + $0x18] sm:$0xff]
    %v48 = vld [vmem:[#allocation2 + $0x20] sm:$0xff]
    %v49 = vld [vmem:[#allocation2 + $0x28] sm:$0xff]
    %v50 = vld [vmem:[#allocation2 + $0x30] sm:$0xff]
    %v51 = vld [vmem:[#allocation2 + $0x38] sm:$0xff]
    %v52 = vld [vmem:[#allocation2 + $0x40] sm:$0xff]
    %v53 = vld [vmem:[#allocation2 + $0x48] sm:$0xff]
    %v54 = vld [vmem:[#allocation2 + $0x50] sm:$0xff]
    %v55 = vld [vmem:[#allocation2 + $0x58] sm:$0xff]
    %v56 = vld [vmem:[#allocation2 + $0x60] sm:$0xff]
    %v57 = vld [vmem:[#allocation2 + $0x68] sm:$0xff]
    %v58 = vld [vmem:[#allocation2 + $0x70] sm:$0xff]
    %v59 = vld [vmem:[#allocation2 + $0x78] sm:$0xff]
    %v60 = vpack.c.bf16 %v45, %v44
    %v61 = vpack.c.bf16 %v47, %v46
    %v62 = vpack.c.bf16 %v49, %v48
    %v63 = vpack.c.bf16 %v51, %v50
    %v64 = vpack.c.bf16 %v53, %v52
    %v65 = vpack.c.bf16 %v55, %v54
    %v66 = vpack.c.bf16 %v57, %v56
    %v67 = vpack.c.bf16 %v59, %v58
    %v68 = vld [vmem:[#allocation5] sm:$0xf]
    %v69 = vld [vmem:[#allocation5 + $0x4] sm:$0xf]
    %v70 = vld [vmem:[#allocation5 + $0x8] sm:$0xf]
    %v71 = vld [vmem:[#allocation5 + $0xc] sm:$0xf]
    %v72 = vld [vmem:[#allocation5 + $0x10] sm:$0xf]
    %v73 = vld [vmem:[#allocation5 + $0x14] sm:$0xf]
    %v74 = vld [vmem:[#allocation5 + $0x18] sm:$0xf]
    %v75 = vld [vmem:[#allocation5 + $0x1c] sm:$0xf]
    %v76 = vld [vmem:[#allocation5 + $0x20] sm:$0xf]
    %v77 = vld [vmem:[#allocation5 + $0x24] sm:$0xf]
    %v78 = vld [vmem:[#allocation5 + $0x28] sm:$0xf]
    %v79 = vld [vmem:[#allocation5 + $0x2c] sm:$0xf]
    %v80 = vld [vmem:[#allocation5 + $0x30] sm:$0xf]
    %v81 = vld [vmem:[#allocation5 + $0x34] sm:$0xf]
    %v82 = vld [vmem:[#allocation5 + $0x38] sm:$0xf]
    %v83 = vld [vmem:[#allocation5 + $0x3c] sm:$0xf]
    %v84 = vld [vmem:[%s2] sm:$0x1]
    %v86 = vlaneseq
    %v87 = vshrl.u32 %v86, 7
    %v88 = vsub.s32 0, %v87
    %v89 = vrot.slane %v84, %v88
    %v107 = vunpack.c.l.b16 %v68
    %v108 = vunpack.c.l.b16 %v69
    %v109 = vunpack.c.l.b16 %v70
    %v110 = vunpack.c.l.b16 %v71
    %v111 = vunpack.c.l.b16 %v72
    %v112 = vunpack.c.l.b16 %v73
    %v113 = vunpack.c.l.b16 %v74
    %v114 = vunpack.c.l.b16 %v75
    %v115 = vunpack.c.l.b16 %v76
    %v116 = vunpack.c.l.b16 %v77
    %v117 = vunpack.c.l.b16 %v78
    %v118 = vunpack.c.l.b16 %v79
    %v119 = vunpack.c.l.b16 %v80
    %v120 = vunpack.c.l.b16 %v81
    %v121 = vunpack.c.l.b16 %v82
    %v122 = vunpack.c.l.b16 %v83
    %v123 = vpack.c.b16 %v108, %v107
    %v124 = vpack.c.b16 %v110, %v109
    %v125 = vpack.c.b16 %v112, %v111
    %v126 = vpack.c.b16 %v114, %v113
    %v127 = vpack.c.b16 %v116, %v115
    %v128 = vpack.c.b16 %v118, %v117
    %v129 = vpack.c.b16 %v120, %v119
    %v130 = vpack.c.b16 %v122, %v121
    %139 = vmatprep.subr.bf16.mxu0 0
    %140 = vmatpush1.bf16.msra.mxu0 %v123
    %141 = vmatprep.subr.bf16.mxu0 0
    %142 = vmatpush1.bf16.msra.mxu0 %v124
    %143 = vmatprep.subr.bf16.mxu0 0
    %144 = vmatpush1.bf16.msra.mxu0 %v125
    %145 = vmatprep.subr.bf16.mxu0 0
    %146 = vmatpush1.bf16.msra.mxu0 %v126
    %147 = vmatprep.subr.bf16.mxu0 0
    %148 = vmatpush1.bf16.msra.mxu0 %v127
    %149 = vmatprep.subr.bf16.mxu0 0
    %150 = vmatpush1.bf16.msra.mxu0 %v128
    %151 = vmatprep.subr.bf16.mxu0 0
    %152 = vmatpush1.bf16.msra.mxu0 %v129
    %153 = vmatprep.subr.bf16.mxu0 0
    %154 = vmatpush1.bf16.msra.mxu0 %v130
    %155 = vmatprep.subr.bf16.mxu0 0
    %156 = vmatpush1.bf16.msra.mxu0 0
    %157 = vmatprep.subr.bf16.mxu0 0
    %158 = vmatpush1.bf16.msra.mxu0 0
    %159 = vmatprep.subr.bf16.mxu0 0
    %160 = vmatpush1.bf16.msra.mxu0 0
    %161 = vmatprep.subr.bf16.mxu0 0
    %162 = vmatpush1.bf16.msra.mxu0 0
    %163 = vmatprep.subr.bf16.mxu0 0
    %164 = vmatpush1.bf16.msra.mxu0 0
    %165 = vmatprep.subr.bf16.mxu0 0
    %166 = vmatpush1.bf16.msra.mxu0 0
    %167 = vmatprep.subr.bf16.mxu0 0
    %168 = vmatpush1.bf16.msra.mxu0 0
    %169 = vmatprep.subr.bf16.mxu0 0
    %170 = vmatpush1.bf16.msra.mxu0 0
    %171 = vmatprep.mubr.bf16.mxu0 0
    %172 = vmatmul.mubr.bf16.gmra.mrb[0].mxu0 %v60
    %v173 = vpop.f32.mrb[0].mxu0
    %v174 = vadd.f32 %v89, %v173
    %v175 = vpop.f32.mrb[0].mxu0
    %v176 = vpop.f32.mrb[0].mxu0
    %v177 = vadd.f32 %v89, %v176
    %v178 = vpop.f32.mrb[0].mxu0
    %179 = vmatprep.mubr.bf16.mxu0 0
    %180 = vmatmul.mubr.bf16.gmra.mrb[0].mxu0 %v61
    %v181 = vpop.f32.mrb[0].mxu0
    %v182 = vadd.f32 %v89, %v181
    %v183 = vpop.f32.mrb[0].mxu0
    %v184 = vpop.f32.mrb[0].mxu0
    %v185 = vadd.f32 %v89, %v184
    %v186 = vpop.f32.mrb[0].mxu0
    %187 = vmatprep.mubr.bf16.mxu0 0
    %188 = vmatmul.mubr.bf16.gmra.mrb[0].mxu0 %v62
    %v189 = vpop.f32.mrb[0].mxu0
    %v190 = vadd.f32 %v89, %v189
    %v191 = vpop.f32.mrb[0].mxu0
    %v192 = vpop.f32.mrb[0].mxu0
    %v193 = vadd.f32 %v89, %v192
    %v194 = vpop.f32.mrb[0].mxu0
    %195 = vmatprep.mubr.bf16.mxu0 0
    %196 = vmatmul.mubr.bf16.gmra.mrb[0].mxu0 %v63
    %v197 = vpop.f32.mrb[0].mxu0
    %v198 = vadd.f32 %v89, %v197
    %v199 = vpop.f32.mrb[0].mxu0
    %v200 = vpop.f32.mrb[0].mxu0
    %v201 = vadd.f32 %v89, %v200
    %v202 = vpop.f32.mrb[0].mxu0
    %203 = vmatprep.mubr.bf16.mxu0 0
    %204 = vmatmul.mubr.bf16.gmra.mrb[0].mxu0 %v64
    %v205 = vpop.f32.mrb[0].mxu0
    %v206 = vadd.f32 %v89, %v205
    %v207 = vpop.f32.mrb[0].mxu0
    %v208 = vpop.f32.mrb[0].mxu0
    %v209 = vadd.f32 %v89, %v208
    %v210 = vpop.f32.mrb[0].mxu0
    %211 = vmatprep.mubr.bf16.mxu0 0
    %212 = vmatmul.mubr.bf16.gmra.mrb[0].mxu0 %v65
    %v213 = vpop.f32.mrb[0].mxu0
    %v214 = vadd.f32 %v89, %v213
    %v215 = vpop.f32.mrb[0].mxu0
    %v216 = vpop.f32.mrb[0].mxu0
    %v217 = vadd.f32 %v89, %v216
    %v218 = vpop.f32.mrb[0].mxu0
    %219 = vmatprep.mubr.bf16.mxu0 0
    %220 = vmatmul.mubr.bf16.gmra.mrb[0].mxu0 %v66
    %v221 = vpop.f32.mrb[0].mxu0
    %v222 = vadd.f32 %v89, %v221
    %v223 = vpop.f32.mrb[0].mxu0
    %v224 = vpop.f32.mrb[0].mxu0
    %v225 = vadd.f32 %v89, %v224
    %v226 = vpop.f32.mrb[0].mxu0
    %227 = vmatprep.mubr.bf16.mxu0 0
    %228 = vmatmul.mubr.bf16.gmra.mrb[0].mxu0 %v67
    %v229 = vpop.f32.mrb[0].mxu0
    %v230 = vadd.f32 %v89, %v229
    %v231 = vpop.f32.mrb[0].mxu0
    %v232 = vpop.f32.mrb[0].mxu0
    %v233 = vadd.f32 %v89, %v232
    %v234 = vpop.f32.mrb[0].mxu0
    %235 = vdwg.mxu0
    %v236 = vadd.f32 %v174, %v44
    %v237 = vadd.f32 %v177, %v45
    %v238 = vadd.f32 %v182, %v46
    %v239 = vadd.f32 %v185, %v47
    %v240 = vadd.f32 %v190, %v48
    %v241 = vadd.f32 %v193, %v49
    %v242 = vadd.f32 %v198, %v50
    %v243 = vadd.f32 %v201, %v51
    %v244 = vadd.f32 %v206, %v52
    %v245 = vadd.f32 %v209, %v53
    %v246 = vadd.f32 %v214, %v54
    %v247 = vadd.f32 %v217, %v55
    %v248 = vadd.f32 %v222, %v56
    %v249 = vadd.f32 %v225, %v57
    %v250 = vadd.f32 %v230, %v58
    %v251 = vadd.f32 %v233, %v59
    %252 = vst [vmem:[#allocation7] sm:$0xff] %v236
    %253 = vst [vmem:[#allocation7 + $0x8] sm:$0xff] %v237
    %254 = vst [vmem:[#allocation7 + $0x10] sm:$0xff] %v238
    %255 = vst [vmem:[#allocation7 + $0x18] sm:$0xff] %v239
    %256 = vst [vmem:[#allocation7 + $0x20] sm:$0xff] %v240
    %257 = vst [vmem:[#allocation7 + $0x28] sm:$0xff] %v241
    %258 = vst [vmem:[#allocation7 + $0x30] sm:$0xff] %v242
    %259 = vst [vmem:[#allocation7 + $0x38] sm:$0xff] %v243
    %260 = vst [vmem:[#allocation7 + $0x40] sm:$0xff] %v244
    %261 = vst [vmem:[#allocation7 + $0x48] sm:$0xff] %v245
    %262 = vst [vmem:[#allocation7 + $0x50] sm:$0xff] %v246
    %263 = vst [vmem:[#allocation7 + $0x58] sm:$0xff] %v247
    %264 = vst [vmem:[#allocation7 + $0x60] sm:$0xff] %v248
    %265 = vst [vmem:[#allocation7 + $0x68] sm:$0xff] %v249
    %266 = vst [vmem:[#allocation7 + $0x70] sm:$0xff] %v250
    %267 = vst [vmem:[#allocation7 + $0x78] sm:$0xff] %v251
    // Predicated region
    $region22: #{tpu_custom_call.1} parent=1 // pred_check
      _
    $region23: #{tpu_custom_call.1} parent=1 // pred_check_branch
      %269 = sbr.rel (0) target = $region25
    $region24: #{tpu_custom_call.1} parent=1 // pred_region
      %s271 = ssub.s32 2048, 2048
      %272 = vsyncadd [#allocation4], %s271
      %s273 = sshll.u32 [#allocation7], 4
      %s274 = int_to_ptr.vmem [resolvable:$true] %s273
      %279 = dma.vmem_to_hbm [thread:$0]  %s274, 2048, %s3, [#allocation4], 128, 128, 8
    $region25: #{tpu_custom_call.1} parent=1 // pred_fallthru
      _
    // Predicated region
    $region26: #{tpu_custom_call.1} parent=1 // pred_check
      _
    $region27: #{tpu_custom_call.1} parent=1 // pred_check_branch
      %281 = sbr.rel (0) target = $region29
    $region28: #{tpu_custom_call.1} parent=1 // pred_region
      %282 = dma.done [#allocation4], 2048
    $region29: #{tpu_custom_call.1} parent=1 // pred_fallthru
      _
    %283 = vsyncpa [#allocation3], 1
    %284 = vsyncpa [#allocation6], 1
    %285 = vsyncpa [#allocation4], 1

</llo_original>
